<compile_context>
chip_gen: v7x
topology: tpu7x:2x2x1
jax: 0.10.0
libtpu: 0.0.40
codegen_flags: <defaults>
</compile_context>

<pallas_src>
import functools

import jax
import jax.numpy as jnp
from jax.experimental import pallas as pl
from jax.experimental.pallas import tpu as pltpu


# ----------------------------------------------------------------------------
# Kernel: one decode step per grid index, weights resident, hidden carried in
# the resident output block.
# ----------------------------------------------------------------------------
def attn_decoder_seq_kernel(
    emb_ref,      # (1, H)   embedded token for this step (weights dtype)
    h0_ref,       # (1, H)   initial hidden state (f32), used at step 0 only
    w_emb_ref,    # (H, H)   attn_combine weight rows acting on the embedding
    b_comb_ref,   # (1, H)   attn_combine bias with the all-ones attention folded in
    w_g_ref,      # (2H, 3H) fused GRU weights: vstack([W_ih, W_hh]), gates [r|z|n]
    b_g_ref,      # (1, 3H)  b_ih + b_hh
    w_hn_ref,     # (H, H)   W_hh n-gate block (needed separately for r*(h_n+b_hn))
    b_hn_ref,     # (1, H)   b_hh n-gate block
    w_out_ref,    # (H, V)   output projection
    b_out_ref,    # (1, V)
    probs_ref,    # OUT (1, V)  log-softmax over vocab for this step
    hid_ref,      # OUT (1, H)  hidden state; resident across the grid (the carry)
):
    H = h0_ref.shape[1]
    t = pl.program_id(0)

    # Initialize the resident hidden-state carry on the first step.
    @pl.when(t == 0)
    def _():
        hid_ref[...] = h0_ref[...]

    h = hid_ref[...]                                   # (1, H) f32
    emb = emb_ref[...]                                 # (1, H) weights dtype
    wdt = w_g_ref.dtype

    # attn_combine + relu.  The attention output is a constant ones-row in the
    # reference module, so its contribution is pre-folded into b_comb_ref.
    x = jnp.dot(emb, w_emb_ref[...], preferred_element_type=jnp.float32)
    x = jnp.maximum(x + b_comb_ref[...], 0.0)          # (1, H) f32

    # Fused GRU: one (1,2H)@(2H,3H) dot gives gi+gh for all gates; the n gate
    # additionally needs h_n separately (PyTorch: n = tanh(i_n + b_in + r*(h_n + b_hn))).
    xh = jnp.concatenate([x.astype(wdt), h.astype(wdt)], axis=1)        # (1, 2H)
    g = jnp.dot(xh, w_g_ref[...], preferred_element_type=jnp.float32) + b_g_ref[...]
    hn = jnp.dot(h.astype(wdt), w_hn_ref[...],
                 preferred_element_type=jnp.float32) + b_hn_ref[...]    # h_n + b_hn

    r = jax.nn.sigmoid(g[:, 0:H])
    z = jax.nn.sigmoid(g[:, H:2 * H])
    n = jnp.tanh(g[:, 2 * H:3 * H] - hn + r * hn)      # = i_n + b_in + r*(h_n + b_hn)
    h_new = (1.0 - z) * n + z * h                      # (1, H) f32
    hid_ref[...] = h_new

    # Output projection + log_softmax(dim=1).
    logits = jnp.dot(h_new.astype(wdt), w_out_ref[...],
                     preferred_element_type=jnp.float32) + b_out_ref[...]
    m = jnp.max(logits, axis=-1, keepdims=True)
    shifted = logits - m
    lse = jnp.log(jnp.sum(jnp.exp(shifted), axis=-1, keepdims=True))
    probs_ref[...] = (shifted - lse).astype(probs_ref.dtype)


def _resident(shape):
    """BlockSpec covering the full array whose index ignores the step -> stays in VMEM."""
    nd = len(shape)
    return pl.BlockSpec(shape, lambda t, _nd=nd: (0,) * _nd)


def attn_decoder_pallas(emb_seq, h0, fp):
    """Run T decoder steps in one pallas_call (weights resident across steps).

    emb_seq: (T, 1, H) embedded tokens (weights dtype)
    h0:      (1, H)    initial hidden state (f32)
    returns (log_probs (T, 1, V) f32, final hidden (1, H) f32)
    """
    T = emb_seq.shape[0]
    H = h0.shape[1]
    V = fp["w_out"].shape[1]

    weights = (fp["w_emb"], fp["b_comb"], fp["w_g"], fp["b_g"],
               fp["w_hn"], fp["b_hn"], fp["w_out"], fp["b_out"])

    in_specs = [
        pl.BlockSpec((None, 1, H), lambda t: (t, 0, 0)),   # per-step embedding
        _resident(h0.shape),                               # initial hidden
    ] + [_resident(w.shape) for w in weights]              # all weights resident

    out_specs = (
        pl.BlockSpec((None, 1, V), lambda t: (t, 0, 0)),   # per-step log-probs
        _resident((1, H)),                                 # hidden carry (resident)
    )
    out_shape = (
        jax.ShapeDtypeStruct((T, 1, V), jnp.float32),
        jax.ShapeDtypeStruct((1, H), jnp.float32),
    )

    return pl.pallas_call(
        attn_decoder_seq_kernel,
        grid=(T,),
        out_shape=out_shape,
        in_specs=in_specs,
        out_specs=out_specs,
        compiler_params=pltpu.CompilerParams(
            dimension_semantics=("arbitrary",)),           # sequential recurrence
    )(emb_seq, h0, *weights)


# ----------------------------------------------------------------------------
# Wrapper glue mirroring the PyTorch module
# ----------------------------------------------------------------------------
def attn_decoder_rnn_forward(token, output_enc, hidden_dec, fused_params):
    """Mirrors AttnDecoderRNN.forward(input, output_enc, hidden_dec), attn_type='dot'.

    token:      int32 scalar token id
    output_enc: (1, S, H) encoder outputs (never reaches the outputs: the
                reference applies F.softmax over a singleton axis, so the
                attention weights are constant ones)
    hidden_dec: (1, 1, H) previous decoder hidden state
    returns (log_probs (1, V), hidden_dec (1, 1, H), attn_weights (1, 1, H))
    """
    del output_enc  # dead in the reference math; its DMA/compute is removed
    H = hidden_dec.shape[-1]
    emb = fused_params["embedding"][token].reshape(1, 1, H)   # gather stays in glue
    log_probs, h_new = attn_decoder_pallas(emb, hidden_dec.reshape(1, H), fused_params)
    attn_weights = jnp.ones((1, 1, H), jnp.float32)           # faithful constant
    return log_probs[0], h_new.reshape(1, 1, H), attn_weights


def attn_decoder_rnn_decode(tokens, hidden_dec, fused_params):
    """Teacher-forced multi-step decode: one pallas_call for all T steps."""
    T = tokens.shape[0]
    H = hidden_dec.shape[-1]
    emb = jnp.take(fused_params["embedding"], tokens, axis=0).reshape(T, 1, H)
    log_probs, h_new = attn_decoder_pallas(emb, hidden_dec.reshape(1, H), fused_params)
    return log_probs, h_new.reshape(1, 1, H)


# ----------------------------------------------------------------------------
# Parameters
# ----------------------------------------------------------------------------
def init_params(key, hidden_size, output_size):
    """Raw parameters in (in_features, out_features) layout (torch weights transposed)."""
    H, V = hidden_size, output_size
    ks = jax.random.split(key, 10)
    u = lambda k, shape, s: jax.random.uniform(k, shape, jnp.float32, -s, s)
    scale = 1.0 / jnp.sqrt(H).astype(jnp.float32)
    return {
        "embedding": jax.random.normal(ks[0], (V, H), jnp.float32),
        "w_comb": u(ks[1], (2 * H, H), scale),   # nn.Linear(2H, H) weight, transposed
        "b_comb": u(ks[2], (1, H), scale),
        "w_ih": u(ks[3], (H, 3 * H), scale),     # nn.GRU weight_ih_l0, transposed, [r|z|n]
        "b_ih": u(ks[4], (1, 3 * H), scale),
        "w_hh": u(ks[5], (H, 3 * H), scale),
        "b_hh": u(ks[6], (1, 3 * H), scale),
        "w_out": u(ks[7], (H, V), scale),        # nn.Linear(H, V) weight, transposed
        "b_out": u(ks[8], (1, V), scale),
    }


def fuse_params(p, dtype=jnp.bfloat16):
    """Fold the constant attention and fuse GRU weights into kernel-ready tensors."""
    H = p["w_ih"].shape[0]
    w_comb = p["w_comb"]
    # ones-row (constant attention output) @ first H rows of w_comb -> bias fold
    b_eff = p["b_comb"] + jnp.sum(w_comb[:H], axis=0, keepdims=True)
    return {
        "embedding": p["embedding"].astype(dtype),
        "w_emb": w_comb[H:].astype(dtype),                                   # (H, H)
        "b_comb": b_eff.astype(jnp.float32),
        "w_g": jnp.concatenate([p["w_ih"], p["w_hh"]], axis=0).astype(dtype),  # (2H, 3H)
        "b_g": (p["b_ih"] + p["b_hh"]).astype(jnp.float32),
        "w_hn": p["w_hh"][:, 2 * H:].astype(dtype),                          # (H, H)
        "b_hn": p["b_hh"][:, 2 * H:].astype(jnp.float32),
        "w_out": p["w_out"].astype(dtype),
        "b_out": p["b_out"].astype(jnp.float32),
    }


if __name__ == "__main__":
    # H and V chosen as multiples of 128 (lane-dense stores, aligned gate slices)
    # while staying small; S is the (unused) encoder length.
    H, V, S = 128, 256, 8
    key = jax.random.PRNGKey(0)
    kp, ke, kh = jax.random.split(key, 3)

    params = fuse_params(init_params(kp, H, V), dtype=jnp.bfloat16)

    token = jnp.int32(3)
    output_enc = jax.random.normal(ke, (1, S, H), jnp.float32)
    hidden_dec = jax.random.normal(kh, (1, 1, H), jnp.float32)

    # Single-step forward (mirrors AttnDecoderRNN.forward).
    log_probs, new_hidden, attn_weights = attn_decoder_rnn_forward(
        token, output_enc, hidden_dec, params)
    jax.block_until_ready((log_probs, new_hidden, attn_weights))
    assert log_probs.shape == (1, V)
    assert new_hidden.shape == (1, 1, H)
    assert attn_weights.shape == (1, 1, H)

    # Multi-step decode: one pallas_call, weights resident in VMEM across steps.
    tokens = jnp.array([3, 7, 1, 5], dtype=jnp.int32)
    seq_log_probs, final_hidden = attn_decoder_rnn_decode(tokens, hidden_dec, params)
    jax.block_until_ready((seq_log_probs, final_hidden))
    assert seq_log_probs.shape == (tokens.shape[0], 1, V)
    assert final_hidden.shape == (1, 1, H)

    print("KERNEL_OK")
</pallas_src>

<mosaic_0001>
module attributes {stable_mosaic.version = 11 : i64} {
  func.func @attn_decoder_seq_kernel(%arg0: i32, %arg1: memref<1x1x128xbf16, #tpu.memory_space<vmem>>, %arg2: memref<1x128xf32, #tpu.memory_space<vmem>>, %arg3: memref<128x128xbf16, #tpu.memory_space<vmem>>, %arg4: memref<1x128xf32, #tpu.memory_space<vmem>>, %arg5: memref<256x384xbf16, #tpu.memory_space<vmem>>, %arg6: memref<1x384xf32, #tpu.memory_space<vmem>>, %arg7: memref<128x128xbf16, #tpu.memory_space<vmem>>, %arg8: memref<1x128xf32, #tpu.memory_space<vmem>>, %arg9: memref<128x256xbf16, #tpu.memory_space<vmem>>, %arg10: memref<1x256xf32, #tpu.memory_space<vmem>>, %arg11: memref<1x1x256xf32, #tpu.memory_space<vmem>>, %arg12: memref<1x128xf32, #tpu.memory_space<vmem>>) attributes {dimension_semantics = [#tpu.dimension_semantics<arbitrary>], iteration_bounds = array<i64: 1>, scalar_prefetch = 0 : i64, scratch_operands = 0 : i64, tpu.core_type = #tpu.core_type<tc>, window_params = [{transform_indices = @transform_0, window_bounds = array<i64: 1, 1, 128>}, {pipeline_mode = #tpu.pipeline_mode<synchronous>, transform_indices = @transform_1, window_bounds = array<i64: 1, 128>}, {pipeline_mode = #tpu.pipeline_mode<synchronous>, transform_indices = @transform_2, window_bounds = array<i64: 128, 128>}, {pipeline_mode = #tpu.pipeline_mode<synchronous>, transform_indices = @transform_3, window_bounds = array<i64: 1, 128>}, {pipeline_mode = #tpu.pipeline_mode<synchronous>, transform_indices = @transform_4, window_bounds = array<i64: 256, 384>}, {pipeline_mode = #tpu.pipeline_mode<synchronous>, transform_indices = @transform_5, window_bounds = array<i64: 1, 384>}, {pipeline_mode = #tpu.pipeline_mode<synchronous>, transform_indices = @transform_6, window_bounds = array<i64: 128, 128>}, {pipeline_mode = #tpu.pipeline_mode<synchronous>, transform_indices = @transform_7, window_bounds = array<i64: 1, 128>}, {pipeline_mode = #tpu.pipeline_mode<synchronous>, transform_indices = @transform_8, window_bounds = array<i64: 128, 256>}, {pipeline_mode = #tpu.pipeline_mode<synchronous>, transform_indices = @transform_9, window_bounds = array<i64: 1, 256>}, {transform_indices = @transform_10, window_bounds = array<i64: 1, 1, 256>}, {pipeline_mode = #tpu.pipeline_mode<synchronous>, transform_indices = @transform_11, window_bounds = array<i64: 1, 128>}]} {
    %c0_i32 = arith.constant 0 : i32
    %0 = arith.cmpi eq, %arg0, %c0_i32 : i32
    %1 = arith.extui %0 : i1 to i32
    %c0_i32_0 = arith.constant 0 : i32
    %2 = arith.cmpi ne, %1, %c0_i32_0 : i32
    scf.if %2 {
      %c0_35 = arith.constant 0 : index
      %c0_36 = arith.constant 0 : index
      %65 = vector.load %arg2[%c0_35, %c0_36] : memref<1x128xf32, #tpu.memory_space<vmem>>, vector<1x128xf32>
      %c0_37 = arith.constant 0 : index
      %c0_38 = arith.constant 0 : index
      %66 = vector.load %arg12[%c0_37, %c0_38] : memref<1x128xf32, #tpu.memory_space<vmem>>, vector<1x128xf32>
      tpu.vector_store %arg12[%c0_37, %c0_38], %65 {strides = array<i32>} : memref<1x128xf32, #tpu.memory_space<vmem>>, vector<1x128xf32>,
    } else {
    }
    %c0 = arith.constant 0 : index
    %c0_1 = arith.constant 0 : index
    %3 = vector.load %arg12[%c0, %c0_1] : memref<1x128xf32, #tpu.memory_space<vmem>>, vector<1x128xf32>
    %c0_2 = arith.constant 0 : index
    %c0_3 = arith.constant 0 : index
    %c0_4 = arith.constant 0 : index
    %4 = vector.load %arg1[%c0_2, %c0_3, %c0_4] : memref<1x1x128xbf16, #tpu.memory_space<vmem>>, vector<1x1x128xbf16>
    %5 = vector.shape_cast %4 : vector<1x1x128xbf16> to vector<1x128xbf16>
    %c0_5 = arith.constant 0 : index
    %c0_6 = arith.constant 0 : index
    %6 = vector.load %arg3[%c0_5, %c0_6] : memref<128x128xbf16, #tpu.memory_space<vmem>>, vector<128x128xbf16>
    %cst = arith.constant dense<0.000000e+00> : vector<1x128xf32>
    %7 = tpu.matmul %5, %6, %cst {dimension_numbers = #tpu.dot_dimension_numbers<[1], [0], [0], [1], [0, 0, 1, 1], [], []>} : vector<1x128xbf16>, vector<128x128xbf16>, vector<1x128xf32> -> vector<1x128xf32>
    %c0_7 = arith.constant 0 : index
    %c0_8 = arith.constant 0 : index
    %8 = vector.load %arg4[%c0_7, %c0_8] : memref<1x128xf32, #tpu.memory_space<vmem>>, vector<1x128xf32>
    %9 = arith.addf %7, %8 : vector<1x128xf32>
    %cst_9 = arith.constant 0.000000e+00 : f32
    %10 = vector.broadcast %cst_9 : f32 to vector<1x128xf32>
    %11 = arith.maximumf %9, %10 : vector<1x128xf32>
    %12 = arith.truncf %11 : vector<1x128xf32> to vector<1x128xbf16>
    %13 = arith.truncf %3 : vector<1x128xf32> to vector<1x128xbf16>
    %14 = tpu.concatenate %12, %13 in 1 : vector<1x128xbf16>, vector<1x128xbf16> -> vector<1x256xbf16>
    %c0_10 = arith.constant 0 : index
    %c0_11 = arith.constant 0 : index
    %15 = vector.load %arg5[%c0_10, %c0_11] : memref<256x384xbf16, #tpu.memory_space<vmem>>, vector<256x384xbf16>
    %cst_12 = arith.constant dense<0.000000e+00> : vector<1x384xf32>
    %16 = tpu.matmul %14, %15, %cst_12 {dimension_numbers = #tpu.dot_dimension_numbers<[1], [0], [0], [1], [0, 0, 1, 1], [], []>} : vector<1x256xbf16>, vector<256x384xbf16>, vector<1x384xf32> -> vector<1x384xf32>
    %c0_13 = arith.constant 0 : index
    %c0_14 = arith.constant 0 : index
    %17 = vector.load %arg6[%c0_13, %c0_14] : memref<1x384xf32, #tpu.memory_space<vmem>>, vector<1x384xf32>
    %18 = arith.addf %16, %17 : vector<1x384xf32>
    %19 = arith.truncf %3 : vector<1x128xf32> to vector<1x128xbf16>
    %c0_15 = arith.constant 0 : index
    %c0_16 = arith.constant 0 : index
    %20 = vector.load %arg7[%c0_15, %c0_16] : memref<128x128xbf16, #tpu.memory_space<vmem>>, vector<128x128xbf16>
    %cst_17 = arith.constant dense<0.000000e+00> : vector<1x128xf32>
    %21 = tpu.matmul %19, %20, %cst_17 {dimension_numbers = #tpu.dot_dimension_numbers<[1], [0], [0], [1], [0, 0, 1, 1], [], []>} : vector<1x128xbf16>, vector<128x128xbf16>, vector<1x128xf32> -> vector<1x128xf32>
    %c0_18 = arith.constant 0 : index
    %c0_19 = arith.constant 0 : index
    %22 = vector.load %arg8[%c0_18, %c0_19] : memref<1x128xf32, #tpu.memory_space<vmem>>, vector<1x128xf32>
    %23 = arith.addf %21, %22 : vector<1x128xf32>
    %24 = vector.extract_strided_slice %18 {offsets = [0, 0], sizes = [1, 128], strides = [1, 1]} : vector<1x384xf32> to vector<1x128xf32>
    %25 = arith.negf %24 : vector<1x128xf32>
    %26 = math.exp %25 : vector<1x128xf32>
    %cst_20 = arith.constant 1.000000e+00 : f32
    %27 = vector.broadcast %cst_20 : f32 to vector<1x128xf32>
    %28 = arith.addf %27, %26 : vector<1x128xf32>
    %29 = arith.divf %27, %28 : vector<1x128xf32>
    %30 = vector.extract_strided_slice %18 {offsets = [0, 128], sizes = [1, 128], strides = [1, 1]} : vector<1x384xf32> to vector<1x128xf32>
    %31 = arith.negf %30 : vector<1x128xf32>
    %32 = math.exp %31 : vector<1x128xf32>
    %cst_21 = arith.constant 1.000000e+00 : f32
    %33 = vector.broadcast %cst_21 : f32 to vector<1x128xf32>
    %34 = arith.addf %33, %32 : vector<1x128xf32>
    %35 = arith.divf %33, %34 : vector<1x128xf32>
    %36 = vector.extract_strided_slice %18 {offsets = [0, 256], sizes = [1, 128], strides = [1, 1]} : vector<1x384xf32> to vector<1x128xf32>
    %37 = arith.subf %36, %23 : vector<1x128xf32>
    %38 = arith.mulf %29, %23 : vector<1x128xf32>
    %39 = arith.addf %37, %38 : vector<1x128xf32>
    %40 = math.tanh %39 : vector<1x128xf32>
    %cst_22 = arith.constant 1.000000e+00 : f32
    %41 = vector.broadcast %cst_22 : f32 to vector<1x128xf32>
    %42 = arith.subf %41, %35 : vector<1x128xf32>
    %43 = arith.mulf %42, %40 : vector<1x128xf32>
    %44 = arith.mulf %35, %3 : vector<1x128xf32>
    %45 = arith.addf %43, %44 : vector<1x128xf32>
    %c0_23 = arith.constant 0 : index
    %c0_24 = arith.constant 0 : index
    %46 = vector.load %arg12[%c0_23, %c0_24] : memref<1x128xf32, #tpu.memory_space<vmem>>, vector<1x128xf32>
    tpu.vector_store %arg12[%c0_23, %c0_24], %45 {strides = array<i32>} : memref<1x128xf32, #tpu.memory_space<vmem>>, vector<1x128xf32>,
    %47 = arith.truncf %45 : vector<1x128xf32> to vector<1x128xbf16>
    %c0_25 = arith.constant 0 : index
    %c0_26 = arith.constant 0 : index
    %48 = vector.load %arg9[%c0_25, %c0_26] : memref<128x256xbf16, #tpu.memory_space<vmem>>, vector<128x256xbf16>
    %cst_27 = arith.constant dense<0.000000e+00> : vector<1x256xf32>
    %49 = tpu.matmul %47, %48, %cst_27 {dimension_numbers = #tpu.dot_dimension_numbers<[1], [0], [0], [1], [0, 0, 1, 1], [], []>} : vector<1x128xbf16>, vector<128x256xbf16>, vector<1x256xf32> -> vector<1x256xf32>
    %c0_28 = arith.constant 0 : index
    %c0_29 = arith.constant 0 : index
    %50 = vector.load %arg10[%c0_28, %c0_29] : memref<1x256xf32, #tpu.memory_space<vmem>>, vector<1x256xf32>
    %51 = arith.addf %49, %50 : vector<1x256xf32>
    %cst_30 = arith.constant dense<0xFF800000> : vector<1xf32>
    %52 = vector.multi_reduction <maximumf>, %51, %cst_30 [1] : vector<1x256xf32> to vector<1xf32>
    %53 = vector.shape_cast %52 : vector<1xf32> to vector<1x1xf32>
    %54 = vector.broadcast %53 : vector<1x1xf32> to vector<1x256xf32>
    %55 = arith.subf %51, %54 : vector<1x256xf32>
    %56 = math.exp %55 : vector<1x256xf32>
    %cst_31 = arith.constant dense<0.000000e+00> : vector<1xf32>
    %57 = vector.multi_reduction <add>, %56, %cst_31 [1] : vector<1x256xf32> to vector<1xf32>
    %58 = vector.shape_cast %57 : vector<1xf32> to vector<1x1xf32>
    %59 = math.log %58 : vector<1x1xf32>
    %60 = vector.broadcast %59 : vector<1x1xf32> to vector<1x256xf32>
    %61 = arith.subf %55, %60 : vector<1x256xf32>
    %c0_32 = arith.constant 0 : index
    %c0_33 = arith.constant 0 : index
    %c0_34 = arith.constant 0 : index
    %62 = vector.load %arg11[%c0_32, %c0_33, %c0_34] : memref<1x1x256xf32, #tpu.memory_space<vmem>>, vector<1x1x256xf32>
    %63 = vector.shape_cast %62 : vector<1x1x256xf32> to vector<1x256xf32>
    %64 = vector.shape_cast %61 : vector<1x256xf32> to vector<1x1x256xf32>
    tpu.vector_store %arg11[%c0_32, %c0_33, %c0_34], %64 {strides = array<i32>} : memref<1x1x256xf32, #tpu.memory_space<vmem>>, vector<1x1x256xf32>,
    return
  }
  func.func @transform_0(%arg0: i32) -> (i32, i32, i32) {
    %c0_i32 = arith.constant 0 : i32
    %c0_i32_0 = arith.constant 0 : i32
    %c0_i32_1 = arith.constant 0 : i32
    return %arg0, %c0_i32, %c0_i32_0 : i32, i32, i32
  }
  func.func @transform_1(%arg0: i32) -> (i32, i32) {
    %c0_i32 = arith.constant 0 : i32
    %c0_i32_0 = arith.constant 0 : i32
    %c0_i32_1 = arith.constant 0 : i32
    return %c0_i32, %c0_i32_0 : i32, i32
  }
  func.func @transform_2(%arg0: i32) -> (i32, i32) {
    %c0_i32 = arith.constant 0 : i32
    %c0_i32_0 = arith.constant 0 : i32
    %c0_i32_1 = arith.constant 0 : i32
    return %c0_i32, %c0_i32_0 : i32, i32
  }
  func.func @transform_3(%arg0: i32) -> (i32, i32) {
    %c0_i32 = arith.constant 0 : i32
    %c0_i32_0 = arith.constant 0 : i32
    %c0_i32_1 = arith.constant 0 : i32
    return %c0_i32, %c0_i32_0 : i32, i32
  }
  func.func @transform_4(%arg0: i32) -> (i32, i32) {
    %c0_i32 = arith.constant 0 : i32
    %c0_i32_0 = arith.constant 0 : i32
    %c0_i32_1 = arith.constant 0 : i32
    return %c0_i32, %c0_i32_0 : i32, i32
  }
  func.func @transform_5(%arg0: i32) -> (i32, i32) {
    %c0_i32 = arith.constant 0 : i32
    %c0_i32_0 = arith.constant 0 : i32
    %c0_i32_1 = arith.constant 0 : i32
    return %c0_i32, %c0_i32_0 : i32, i32
  }
  func.func @transform_6(%arg0: i32) -> (i32, i32) {
    %c0_i32 = arith.constant 0 : i32
    %c0_i32_0 = arith.constant 0 : i32
    %c0_i32_1 = arith.constant 0 : i32
    return %c0_i32, %c0_i32_0 : i32, i32
  }
  func.func @transform_7(%arg0: i32) -> (i32, i32) {
    %c0_i32 = arith.constant 0 : i32
    %c0_i32_0 = arith.constant 0 : i32
    %c0_i32_1 = arith.constant 0 : i32
    return %c0_i32, %c0_i32_0 : i32, i32
  }
  func.func @transform_8(%arg0: i32) -> (i32, i32) {
    %c0_i32 = arith.constant 0 : i32
    %c0_i32_0 = arith.constant 0 : i32
    %c0_i32_1 = arith.constant 0 : i32
    return %c0_i32, %c0_i32_0 : i32, i32
  }
  func.func @transform_9(%arg0: i32) -> (i32, i32) {
    %c0_i32 = arith.constant 0 : i32
    %c0_i32_0 = arith.constant 0 : i32
    %c0_i32_1 = arith.constant 0 : i32
    return %c0_i32, %c0_i32_0 : i32, i32
  }
  func.func @transform_10(%arg0: i32) -> (i32, i32, i32) {
    %c0_i32 = arith.constant 0 : i32
    %c0_i32_0 = arith.constant 0 : i32
    %c0_i32_1 = arith.constant 0 : i32
    return %arg0, %c0_i32, %c0_i32_0 : i32, i32, i32
  }
  func.func @transform_11(%arg0: i32) -> (i32, i32) {
    %c0_i32 = arith.constant 0 : i32
    %c0_i32_0 = arith.constant 0 : i32
    %c0_i32_1 = arith.constant 0 : i32
    return %c0_i32, %c0_i32_0 : i32, i32
  }
}

</mosaic_0001>

<llo_original>
// kernel: tpu_custom_call.1
$region0: #{tpu_custom_call.1}
  #allocation0 [shape = 'u32[]', space=smem, size = 0x4, offset = 0x4, fixed_abs, tag = 'smem constant byte address 0x4 - core index']
  #allocation1 [shape = 'u32[144,128]{1,0:T(1,128)}', space=vmem, size = 0x12000, scoped, tag = 'internal scratch']
  %s0 = inlined_call_operand.hbm [shape: bf16[1,1,128], index: 0, kind: input, shape index: {}]
  %s1 = inlined_call_operand.vmem [shape: f32[1,128], index: 1, kind: input, shape index: {}]
  %s2 = inlined_call_operand.hbm [shape: bf16[128,128], index: 2, kind: input, shape index: {}]
  %s3 = inlined_call_operand.vmem [shape: f32[1,128], index: 3, kind: input, shape index: {}]
  %s4 = inlined_call_operand.hbm [shape: bf16[256,384], index: 4, kind: input, shape index: {}]
  %s5 = inlined_call_operand.vmem [shape: f32[1,384], index: 5, kind: input, shape index: {}]
  %s6 = inlined_call_operand.hbm [shape: bf16[128,128], index: 6, kind: input, shape index: {}]
  %s7 = inlined_call_operand.vmem [shape: f32[1,128], index: 7, kind: input, shape index: {}]
  %s8 = inlined_call_operand.hbm [shape: bf16[128,256], index: 8, kind: input, shape index: {}]
  %s9 = inlined_call_operand.vmem [shape: f32[1,256], index: 9, kind: input, shape index: {}]
  %s10 = inlined_call_operand.hbm [shape: f32[1,1,256], index: 10, kind: output, shape index: {0}]
  %s11 = inlined_call_operand.hbm [shape: f32[1,128], index: 11, kind: output, shape index: {1}]
  %12 = xla_tuple %s10, %s11
  %s13 = sld [smem:[#allocation0]]
  $region82: #{tpu_custom_call.1} parent=0
    _
  %s15 = ssub.s32 1, %s13
  %s16 = scalar_select 0, %s15, %s13
  $region1: #{tpu_custom_call.1} parent=0
    #allocation2 [shape = 'u8[512]{0}', space=vmem, size = 0x400, scoped, tag = 'input window, operand 0, single buffered']
    #allocation3 [shape = 's32[1]{0}', space=sflag, size = 0x4, scoped, tag = 'scoped memory for tpu_custom_call.1']
    #allocation4 [shape = 's32[1]{0}', space=sflag, size = 0x4, scoped, tag = 'scoped memory for tpu_custom_call.1']
    #allocation5 [shape = 'u8[32768]{0}', space=vmem, size = 0x8000, scoped, tag = 'input window, operand 2, single buffered']
    #allocation6 [shape = 's32[1]{0}', space=sflag, size = 0x4, scoped, tag = 'scoped memory for tpu_custom_call.1']
    #allocation7 [shape = 'u8[196608]{0}', space=vmem, size = 0x30000, scoped, tag = 'input window, operand 4, single buffered']
    #allocation8 [shape = 'u8[32768]{0}', space=vmem, size = 0x8000, scoped, tag = 'input window, operand 6, single buffered']
    #allocation9 [shape = 's32[1]{0}', space=sflag, size = 0x4, scoped, tag = 'scoped memory for tpu_custom_call.1']
    #allocation10 [shape = 'u8[65536]{0}', space=vmem, size = 0x10000, scoped, tag = 'input window, operand 8, single buffered']
    #allocation11 [shape = 'u8[1024]{0}', space=vmem, size = 0x400, scoped, tag = 'output window, operand 0, single buffered']
    #allocation12 [shape = 'u8[512]{0}', space=vmem, size = 0x400, scoped, tag = 'output window, operand 1, single buffered']
    #allocation13 [shape = 's32[1]{0}', space=sflag, size = 0x4, scoped, tag = 'scoped memory for tpu_custom_call.1']
    %17 = vsyncpa [#allocation3], 0
    %18 = vsyncpa [#allocation6], 0
    %19 = vsyncpa [#allocation9], 0
    %20 = vsyncpa [#allocation4], 0
    %21 = vsyncpa [#allocation13], 0
    // Predicated region
    $region2: #{tpu_custom_call.1} parent=1 // pred_check
      _
    $region3: #{tpu_custom_call.1} parent=1 // pred_check_branch
      %23 = sbr.rel (0) target = $region5
    $region4: #{tpu_custom_call.1} parent=1 // pred_region
      %s25 = ssub.s32 16, 16
      %26 = vsyncadd [#allocation3], %s25
      %s28 = sshll.u32 [#allocation2], 4
      %s29 = int_to_ptr.vmem [resolvable:$true] %s28
      %31 = dma.hbm_to_vmem [thread:$0]  %s0, 16, %s29, [#allocation3]
    $region5: #{tpu_custom_call.1} parent=1 // pred_fallthru
      _
    // Predicated region
    $region6: #{tpu_custom_call.1} parent=1 // pred_check
      _
    $region7: #{tpu_custom_call.1} parent=1 // pred_check_branch
      %33 = sbr.rel (0) target = $region9
    $region8: #{tpu_custom_call.1} parent=1 // pred_region
      _
    $region9: #{tpu_custom_call.1} parent=1 // pred_fallthru
      _
    // Predicated region
    $region10: #{tpu_custom_call.1} parent=1 // pred_check
      _
    $region11: #{tpu_custom_call.1} parent=1 // pred_check_branch
      %35 = sbr.rel (0) target = $region13
    $region12: #{tpu_custom_call.1} parent=1 // pred_region
      %s37 = ssub.s32 1024, 1024
      %38 = vsyncadd [#allocation6], %s37
      %s39 = sshll.u32 [#allocation5], 4
      %s40 = int_to_ptr.vmem [resolvable:$true] %s39
      %45 = dma.hbm_to_vmem [thread:$0]  %s2, 1024, %s40, [#allocation6], 64, 64, 4
    $region13: #{tpu_custom_call.1} parent=1 // pred_fallthru
      _
    // Predicated region
    $region14: #{tpu_custom_call.1} parent=1 // pred_check
      _
    $region15: #{tpu_custom_call.1} parent=1 // pred_check_branch
      %47 = sbr.rel (0) target = $region17
    $region16: #{tpu_custom_call.1} parent=1 // pred_region
      _
    $region17: #{tpu_custom_call.1} parent=1 // pred_fallthru
      _
    // Predicated region
    $region18: #{tpu_custom_call.1} parent=1 // pred_check
      _
    $region19: #{tpu_custom_call.1} parent=1 // pred_check_branch
      %49 = sbr.rel (0) target = $region21
    $region20: #{tpu_custom_call.1} parent=1 // pred_region
      %s51 = ssub.s32 6144, 6144
      %52 = vsyncadd [#allocation6], %s51
      %s53 = sshll.u32 [#allocation7], 4
      %s54 = int_to_ptr.vmem [resolvable:$true] %s53
      %59 = dma.hbm_to_vmem [thread:$0]  %s4, 6144, %s54, [#allocation6], 192, 192, 12
    $region21: #{tpu_custom_call.1} parent=1 // pred_fallthru
      _
    // Predicated region
    $region22: #{tpu_custom_call.1} parent=1 // pred_check
      _
    $region23: #{tpu_custom_call.1} parent=1 // pred_check_branch
      %61 = sbr.rel (0) target = $region25
    $region24: #{tpu_custom_call.1} parent=1 // pred_region
      _
    $region25: #{tpu_custom_call.1} parent=1 // pred_fallthru
      _
    // Predicated region
    $region26: #{tpu_custom_call.1} parent=1 // pred_check
      _
    $region27: #{tpu_custom_call.1} parent=1 // pred_check_branch
      %63 = sbr.rel (0) target = $region29
    $region28: #{tpu_custom_call.1} parent=1 // pred_region
      %s65 = ssub.s32 1024, 1024
      %66 = vsyncadd [#allocation9], %s65
      %s67 = sshll.u32 [#allocation8], 4
      %s68 = int_to_ptr.vmem [resolvable:$true] %s67
      %73 = dma.hbm_to_vmem [thread:$0]  %s6, 1024, %s68, [#allocation9], 64, 64, 4
    $region29: #{tpu_custom_call.1} parent=1 // pred_fallthru
      _
    // Predicated region
    $region30: #{tpu_custom_call.1} parent=1 // pred_check
      _
    $region31: #{tpu_custom_call.1} parent=1 // pred_check_branch
      %75 = sbr.rel (0) target = $region33
    $region32: #{tpu_custom_call.1} parent=1 // pred_region
      _
    $region33: #{tpu_custom_call.1} parent=1 // pred_fallthru
      _
    // Predicated region
    $region34: #{tpu_custom_call.1} parent=1 // pred_check
      _
    $region35: #{tpu_custom_call.1} parent=1 // pred_check_branch
      %77 = sbr.rel (0) target = $region37
    $region36: #{tpu_custom_call.1} parent=1 // pred_region
      %s79 = ssub.s32 2048, 2048
      %80 = vsyncadd [#allocation9], %s79
      %s81 = sshll.u32 [#allocation10], 4
      %s82 = int_to_ptr.vmem [resolvable:$true] %s81
      %87 = dma.hbm_to_vmem [thread:$0]  %s8, 2048, %s82, [#allocation9], 128, 128, 8
    $region37: #{tpu_custom_call.1} parent=1 // pred_fallthru
      _
    // Predicated region
    $region38: #{tpu_custom_call.1} parent=1 // pred_check
      _
    $region39: #{tpu_custom_call.1} parent=1 // pred_check_branch
      %89 = sbr.rel (0) target = $region41
    $region40: #{tpu_custom_call.1} parent=1 // pred_region
      _
    $region41: #{tpu_custom_call.1} parent=1 // pred_fallthru
      _
    // Predicated region
    $region42: #{tpu_custom_call.1} parent=1 // pred_check
      _
    $region43: #{tpu_custom_call.1} parent=1 // pred_check_branch
      %91 = sbr.rel (0) target = $region45
    $region44: #{tpu_custom_call.1} parent=1 // pred_region
      %92 = dma.done [#allocation3], 16
    $region45: #{tpu_custom_call.1} parent=1 // pred_fallthru
      _
    // Predicated region
    $region46: #{tpu_custom_call.1} parent=1 // pred_check
      _
    $region47: #{tpu_custom_call.1} parent=1 // pred_check_branch
      %94 = sbr.rel (0) target = $region49
    $region48: #{tpu_custom_call.1} parent=1 // pred_region
      %95 = dma.done [#allocation6], 1024
    $region49: #{tpu_custom_call.1} parent=1 // pred_fallthru
      _
    // Predicated region
    $region50: #{tpu_custom_call.1} parent=1 // pred_check
      _
    $region51: #{tpu_custom_call.1} parent=1 // pred_check_branch
      %97 = sbr.rel (0) target = $region53
    $region52: #{tpu_custom_call.1} parent=1 // pred_region
      %98 = dma.done [#allocation6], 6144
    $region53: #{tpu_custom_call.1} parent=1 // pred_fallthru
      _
    // Predicated region
    $region54: #{tpu_custom_call.1} parent=1 // pred_check
      _
    $region55: #{tpu_custom_call.1} parent=1 // pred_check_branch
      %100 = sbr.rel (0) target = $region57
    $region56: #{tpu_custom_call.1} parent=1 // pred_region
      %101 = dma.done [#allocation9], 1024
    $region57: #{tpu_custom_call.1} parent=1 // pred_fallthru
      _
    // Predicated region
    $region58: #{tpu_custom_call.1} parent=1 // pred_check
      _
    $region59: #{tpu_custom_call.1} parent=1 // pred_check_branch
      %103 = sbr.rel (0) target = $region61
    $region60: #{tpu_custom_call.1} parent=1 // pred_region
      %104 = dma.done [#allocation9], 2048
    $region61: #{tpu_custom_call.1} parent=1 // pred_fallthru
      _
    %p106 = scmp.eq.s32.totalorder 0, 0
    // Predicated region
    $region62: #{tpu_custom_call.1} parent=1 // pred_check
      %p107 = pneg %p106
    $region63: #{tpu_custom_call.1} parent=1 // pred_check_branch
      %109 = sbr.rel (%p107) target = $region65
    $region64: #{tpu_custom_call.1} parent=1 // pred_region
      %v110 = vld [vmem:[%s1] sm:$0x1]
      %111 = vst [vmem:[#allocation12] sm:$0x1] %v110
    $region65: #{tpu_custom_call.1} parent=1 // pred_fallthru
      _
    %v112 = vld [vmem:[#allocation12] sm:$0x1]
    %v113 = vld [vmem:[#allocation2] sm:$0x1]
    %v114 = vld [vmem:[#allocation5] sm:$0xf]
    %v115 = vld [vmem:[#allocation5 + $0x4] sm:$0xf]
    %v116 = vld [vmem:[#allocation5 + $0x8] sm:$0xf]
    %v117 = vld [vmem:[#allocation5 + $0xc] sm:$0xf]
    %v118 = vld [vmem:[#allocation5 + $0x10] sm:$0xf]
    %v119 = vld [vmem:[#allocation5 + $0x14] sm:$0xf]
    %v120 = vld [vmem:[#allocation5 + $0x18] sm:$0xf]
    %v121 = vld [vmem:[#allocation5 + $0x1c] sm:$0xf]
    %v122 = vld [vmem:[#allocation5 + $0x20] sm:$0xf]
    %v123 = vld [vmem:[#allocation5 + $0x24] sm:$0xf]
    %v124 = vld [vmem:[#allocation5 + $0x28] sm:$0xf]
    %v125 = vld [vmem:[#allocation5 + $0x2c] sm:$0xf]
    %v126 = vld [vmem:[#allocation5 + $0x30] sm:$0xf]
    %v127 = vld [vmem:[#allocation5 + $0x34] sm:$0xf]
    %v128 = vld [vmem:[#allocation5 + $0x38] sm:$0xf]
    %v129 = vld [vmem:[#allocation5 + $0x3c] sm:$0xf]
    %v130 = vld [vmem:[%s3] sm:$0x1]
    %v147 = vunpack.c.l.b16 %v114
    %v148 = vunpack.c.l.b16 %v115
    %v149 = vunpack.c.l.b16 %v116
    %v150 = vunpack.c.l.b16 %v117
    %v151 = vunpack.c.l.b16 %v118
    %v152 = vunpack.c.l.b16 %v119
    %v153 = vunpack.c.l.b16 %v120
    %v154 = vunpack.c.l.b16 %v121
    %v155 = vunpack.c.l.b16 %v122
    %v156 = vunpack.c.l.b16 %v123
    %v157 = vunpack.c.l.b16 %v124
    %v158 = vunpack.c.l.b16 %v125
    %v159 = vunpack.c.l.b16 %v126
    %v160 = vunpack.c.l.b16 %v127
    %v161 = vunpack.c.l.b16 %v128
    %v162 = vunpack.c.l.b16 %v129
    %v163 = vpack.c.b16 %v148, %v147
    %v164 = vpack.c.b16 %v150, %v149
    %v165 = vpack.c.b16 %v152, %v151
    %v166 = vpack.c.b16 %v154, %v153
    %v167 = vpack.c.b16 %v156, %v155
    %v168 = vpack.c.b16 %v158, %v157
    %v169 = vpack.c.b16 %v160, %v159
    %v170 = vpack.c.b16 %v162, %v161
    %179 = vmatprep.subr.bf16.mxu0 0
    %180 = vmatpush1.bf16.msra.mxu0 %v163
    %181 = vmatprep.subr.bf16.mxu0 0
    %182 = vmatpush1.bf16.msra.mxu0 %v164
    %183 = vmatprep.subr.bf16.mxu0 0
    %184 = vmatpush1.bf16.msra.mxu0 %v165
    %185 = vmatprep.subr.bf16.mxu0 0
    %186 = vmatpush1.bf16.msra.mxu0 %v166
    %187 = vmatprep.subr.bf16.mxu0 0
    %188 = vmatpush1.bf16.msra.mxu0 %v167
    %189 = vmatprep.subr.bf16.mxu0 0
    %190 = vmatpush1.bf16.msra.mxu0 %v168
    %191 = vmatprep.subr.bf16.mxu0 0
    %192 = vmatpush1.bf16.msra.mxu0 %v169
    %193 = vmatprep.subr.bf16.mxu0 0
    %194 = vmatpush1.bf16.msra.mxu0 %v170
    %195 = vmatprep.subr.bf16.mxu0 0
    %196 = vmatpush1.bf16.msra.mxu0 0
    %197 = vmatprep.subr.bf16.mxu0 0
    %198 = vmatpush1.bf16.msra.mxu0 0
    %199 = vmatprep.subr.bf16.mxu0 0
    %200 = vmatpush1.bf16.msra.mxu0 0
    %201 = vmatprep.subr.bf16.mxu0 0
    %202 = vmatpush1.bf16.msra.mxu0 0
    %203 = vmatprep.subr.bf16.mxu0 0
    %204 = vmatpush1.bf16.msra.mxu0 0
    %205 = vmatprep.subr.bf16.mxu0 0
    %206 = vmatpush1.bf16.msra.mxu0 0
    %207 = vmatprep.subr.bf16.mxu0 0
    %208 = vmatpush1.bf16.msra.mxu0 0
    %209 = vmatprep.subr.bf16.mxu0 0
    %210 = vmatpush1.bf16.msra.mxu0 0
    %211 = vmatprep.mubr.bf16.mxu0 0
    %212 = vmatmul.mubr.bf16.gmra.mrb[0].mxu0 %v113
    %v213 = vpop.f32.mrb[0].mxu0
    %v214 = vadd.f32 %v130, %v213
    %v215 = vpop.f32.mrb[0].mxu0
    %v216 = vpop.f32.mrb[0].mxu0
    %v217 = vpop.f32.mrb[0].mxu0
    %218 = vdwg.mxu0
    %v219 = vmax.f32 %v214, 0.0
    %v220 = vpack.c.bf16 %v219, %v219
    %v221 = vpack.c.bf16 %v112, %v112
    %v222 = vld [vmem:[#allocation7] sm:$0xff]
    %v223 = vld [vmem:[#allocation7 + $0x8] sm:$0xf]
    %v224 = vld [vmem:[#allocation7 + $0xc] sm:$0xff]
    %v225 = vld [vmem:[#allocation7 + $0x14] sm:$0xf]
    %v226 = vld [vmem:[#allocation7 + $0x18] sm:$0xff]
    %v227 = vld [vmem:[#allocation7 + $0x20] sm:$0xf]
    %v228 = vld [vmem:[#allocation7 + $0x24] sm:$0xff]
    %v229 = vld [vmem:[#allocation7 + $0x2c] sm:$0xf]
    %v230 = vld [vmem:[#allocation7 + $0x30] sm:$0xff]
    %v231 = vld [vmem:[#allocation7 + $0x38] sm:$0xf]
    %v232 = vld [vmem:[#allocation7 + $0x3c] sm:$0xff]
    %v233 = vld [vmem:[#allocation7 + $0x44] sm:$0xf]
    %v234 = vld [vmem:[#allocation7 + $0x48] sm:$0xff]
    %v235 = vld [vmem:[#allocation7 + $0x50] sm:$0xf]
    %v236 = vld [vmem:[#allocation7 + $0x54] sm:$0xff]
    %v237 = vld [vmem:[#allocation7 + $0x5c] sm:$0xf]
    %v238 = vld [vmem:[#allocation7 + $0x60] sm:$0xff]
    %v239 = vld [vmem:[#allocation7 + $0x68] sm:$0xf]
    %v240 = vld [vmem:[#allocation7 + $0x6c] sm:$0xff]
    %v241 = vld [vmem:[#allocation7 + $0x74] sm:$0xf]
    %v242 = vld [vmem:[#allocation7 + $0x78] sm:$0xff]
    %v243 = vld [vmem:[#allocation7 + $0x80] sm:$0xf]
    %v244 = vld [vmem:[#allocation7 + $0x84] sm:$0xff]
    %v245 = vld [vmem:[#allocation7 + $0x8c] sm:$0xf]
    %v246 = vld [vmem:[#allocation7 + $0x90] sm:$0xff]
    %v247 = vld [vmem:[#allocation7 + $0x98] sm:$0xf]
    %v248 = vld [vmem:[#allocation7 + $0x9c] sm:$0xff]
    %v249 = vld [vmem:[#allocation7 + $0xa4] sm:$0xf]
    %v250 = vld [vmem:[#allocation7 + $0xa8] sm:$0xff]
    %v251 = vld [vmem:[#allocation7 + $0xb0] sm:$0xf]
    %v252 = vld [vmem:[#allocation7 + $0xb4] sm:$0xff]
    %v253 = vld [vmem:[#allocation7 + $0xbc] sm:$0xf]
    %v254 = vld [vmem:[#allocation7 + $0xc0] sm:$0xff]
    %v255 = vld [vmem:[#allocation7 + $0xc8] sm:$0xf]
    %v256 = vld [vmem:[#allocation7 + $0xcc] sm:$0xff]
    %v257 = vld [vmem:[#allocation7 + $0xd4] sm:$0xf]
    %v258 = vld [vmem:[#allocation7 + $0xd8] sm:$0xff]
    %v259 = vld [vmem:[#allocation7 + $0xe0] sm:$0xf]
    %v260 = vld [vmem:[#allocation7 + $0xe4] sm:$0xff]
    %v261 = vld [vmem:[#allocation7 + $0xec] sm:$0xf]
    %v262 = vld [vmem:[#allocation7 + $0xf0] sm:$0xff]
    %v263 = vld [vmem:[#allocation7 + $0xf8] sm:$0xf]
    %v264 = vld [vmem:[#allocation7 + $0xfc] sm:$0xff]
    %v265 = vld [vmem:[#allocation7 + $0x104] sm:$0xf]
    %v266 = vld [vmem:[#allocation7 + $0x108] sm:$0xff]
    %v267 = vld [vmem:[#allocation7 + $0x110] sm:$0xf]
    %v268 = vld [vmem:[#allocation7 + $0x114] sm:$0xff]
    %v269 = vld [vmem:[#allocation7 + $0x11c] sm:$0xf]
    %v270 = vld [vmem:[#allocation7 + $0x120] sm:$0xff]
    %v271 = vld [vmem:[#allocation7 + $0x128] sm:$0xf]
    %v272 = vld [vmem:[#allocation7 + $0x12c] sm:$0xff]
    %v273 = vld [vmem:[#allocation7 + $0x134] sm:$0xf]
    %v274 = vld [vmem:[#allocation7 + $0x138] sm:$0xff]
    %v275 = vld [vmem:[#allocation7 + $0x140] sm:$0xf]
    %v276 = vld [vmem:[#allocation7 + $0x144] sm:$0xff]
    %v277 = vld [vmem:[#allocation7 + $0x14c] sm:$0xf]
    %v278 = vld [vmem:[#allocation7 + $0x150] sm:$0xff]
    %v279 = vld [vmem:[#allocation7 + $0x158] sm:$0xf]
    %v280 = vld [vmem:[#allocation7 + $0x15c] sm:$0xff]
    %v281 = vld [vmem:[#allocation7 + $0x164] sm:$0xf]
    %v282 = vld [vmem:[#allocation7 + $0x168] sm:$0xff]
    %v283 = vld [vmem:[#allocation7 + $0x170] sm:$0xf]
    %v284 = vld [vmem:[#allocation7 + $0x174] sm:$0xff]
    %v285 = vld [vmem:[#allocation7 + $0x17c] sm:$0xf]
    %v286 = vld [vmem:[%s5] sm:$0x7]
    %v351 = vunpack.c.l.b16 %v222
    %v352 = vunpack.c.h.b16 %v222
    %v353 = vunpack.c.l.b16 %v223
    %v354 = vunpack.c.l.b16 %v224
    %v355 = vunpack.c.h.b16 %v224
    %v356 = vunpack.c.l.b16 %v225
    %v357 = vunpack.c.l.b16 %v226
    %v358 = vunpack.c.h.b16 %v226
    %v359 = vunpack.c.l.b16 %v227
    %v360 = vunpack.c.l.b16 %v228
    %v361 = vunpack.c.h.b16 %v228
    %v362 = vunpack.c.l.b16 %v229
    %v363 = vunpack.c.l.b16 %v230
    %v364 = vunpack.c.h.b16 %v230
    %v365 = vunpack.c.l.b16 %v231
    %v366 = vunpack.c.l.b16 %v232
    %v367 = vunpack.c.h.b16 %v232
    %v368 = vunpack.c.l.b16 %v233
    %v369 = vunpack.c.l.b16 %v234
    %v370 = vunpack.c.h.b16 %v234
    %v371 = vunpack.c.l.b16 %v235
    %v372 = vunpack.c.l.b16 %v236
    %v373 = vunpack.c.h.b16 %v236
    %v374 = vunpack.c.l.b16 %v237
    %v375 = vunpack.c.l.b16 %v238
    %v376 = vunpack.c.h.b16 %v238
    %v377 = vunpack.c.l.b16 %v239
    %v378 = vunpack.c.l.b16 %v240
    %v379 = vunpack.c.h.b16 %v240
    %v380 = vunpack.c.l.b16 %v241
    %v381 = vunpack.c.l.b16 %v242
    %v382 = vunpack.c.h.b16 %v242
    %v383 = vunpack.c.l.b16 %v243
    %v384 = vunpack.c.l.b16 %v244
    %v385 = vunpack.c.h.b16 %v244
    %v386 = vunpack.c.l.b16 %v245
    %v387 = vunpack.c.l.b16 %v246
    %v388 = vunpack.c.h.b16 %v246
    %v389 = vunpack.c.l.b16 %v247
    %v390 = vunpack.c.l.b16 %v248
    %v391 = vunpack.c.h.b16 %v248
    %v392 = vunpack.c.l.b16 %v249
    %v393 = vunpack.c.l.b16 %v250
    %v394 = vunpack.c.h.b16 %v250
    %v395 = vunpack.c.l.b16 %v251
    %v396 = vunpack.c.l.b16 %v252
    %v397 = vunpack.c.h.b16 %v252
    %v398 = vunpack.c.l.b16 %v253
    %v399 = vunpack.c.l.b16 %v254
    %v400 = vunpack.c.h.b16 %v254
    %v401 = vunpack.c.l.b16 %v255
    %v402 = vunpack.c.l.b16 %v256
    %v403 = vunpack.c.h.b16 %v256
    %v404 = vunpack.c.l.b16 %v257
    %v405 = vunpack.c.l.b16 %v258
    %v406 = vunpack.c.h.b16 %v258
    %v407 = vunpack.c.l.b16 %v259
    %v408 = vunpack.c.l.b16 %v260
    %v409 = vunpack.c.h.b16 %v260
    %v410 = vunpack.c.l.b16 %v261
    %v411 = vunpack.c.l.b16 %v262
    %v412 = vunpack.c.h.b16 %v262
    %v413 = vunpack.c.l.b16 %v263
    %v414 = vunpack.c.l.b16 %v264
    %v415 = vunpack.c.h.b16 %v264
    %v416 = vunpack.c.l.b16 %v265
    %v417 = vunpack.c.l.b16 %v266
    %v418 = vunpack.c.h.b16 %v266
    %v419 = vunpack.c.l.b16 %v267
    %v420 = vunpack.c.l.b16 %v268
    %v421 = vunpack.c.h.b16 %v268
    %v422 = vunpack.c.l.b16 %v269
    %v423 = vunpack.c.l.b16 %v270
    %v424 = vunpack.c.h.b16 %v270
    %v425 = vunpack.c.l.b16 %v271
    %v426 = vunpack.c.l.b16 %v272
    %v427 = vunpack.c.h.b16 %v272
    %v428 = vunpack.c.l.b16 %v273
    %v429 = vunpack.c.l.b16 %v274
    %v430 = vunpack.c.h.b16 %v274
    %v431 = vunpack.c.l.b16 %v275
    %v432 = vunpack.c.l.b16 %v276
    %v433 = vunpack.c.h.b16 %v276
    %v434 = vunpack.c.l.b16 %v277
    %v435 = vunpack.c.l.b16 %v278
    %v436 = vunpack.c.h.b16 %v278
    %v437 = vunpack.c.l.b16 %v279
    %v438 = vunpack.c.l.b16 %v280
    %v439 = vunpack.c.h.b16 %v280
    %v440 = vunpack.c.l.b16 %v281
    %v441 = vunpack.c.l.b16 %v282
    %v442 = vunpack.c.h.b16 %v282
    %v443 = vunpack.c.l.b16 %v283
    %v444 = vunpack.c.l.b16 %v284
    %v445 = vunpack.c.h.b16 %v284
    %v446 = vunpack.c.l.b16 %v285
    %v447 = vpack.c.b16 %v354, %v351
    %v448 = vpack.c.b16 %v355, %v352
    %v449 = vpack.c.b16 %v356, %v353
    %v450 = vpack.c.b16 %v360, %v357
    %v451 = vpack.c.b16 %v361, %v358
    %v452 = vpack.c.b16 %v362, %v359
    %v453 = vpack.c.b16 %v366, %v363
    %v454 = vpack.c.b16 %v367, %v364
    %v455 = vpack.c.b16 %v368, %v365
    %v456 = vpack.c.b16 %v372, %v369
    %v457 = vpack.c.b16 %v373, %v370
    %v458 = vpack.c.b16 %v374, %v371
    %v459 = vpack.c.b16 %v378, %v375
    %v460 = vpack.c.b16 %v379, %v376
    %v461 = vpack.c.b16 %v380, %v377
    %v462 = vpack.c.b16 %v384, %v381
    %v463 = vpack.c.b16 %v385, %v382
    %v464 = vpack.c.b16 %v386, %v383
    %v465 = vpack.c.b16 %v390, %v387
    %v466 = vpack.c.b16 %v391, %v388
    %v467 = vpack.c.b16 %v392, %v389
    %v468 = vpack.c.b16 %v396, %v393
    %v469 = vpack.c.b16 %v397, %v394
    %v470 = vpack.c.b16 %v398, %v395
    %v471 = vpack.c.b16 %v402, %v399
    %v472 = vpack.c.b16 %v403, %v400
    %v473 = vpack.c.b16 %v404, %v401
    %v474 = vpack.c.b16 %v408, %v405
    %v475 = vpack.c.b16 %v409, %v406
    %v476 = vpack.c.b16 %v410, %v407
    %v477 = vpack.c.b16 %v414, %v411
    %v478 = vpack.c.b16 %v415, %v412
    %v479 = vpack.c.b16 %v416, %v413
    %v480 = vpack.c.b16 %v420, %v417
    %v481 = vpack.c.b16 %v421, %v418
    %v482 = vpack.c.b16 %v422, %v419
    %v483 = vpack.c.b16 %v426, %v423
    %v484 = vpack.c.b16 %v427, %v424
    %v485 = vpack.c.b16 %v428, %v425
    %v486 = vpack.c.b16 %v432, %v429
    %v487 = vpack.c.b16 %v433, %v430
    %v488 = vpack.c.b16 %v434, %v431
    %v489 = vpack.c.b16 %v438, %v435
    %v490 = vpack.c.b16 %v439, %v436
    %v491 = vpack.c.b16 %v440, %v437
    %v492 = vpack.c.b16 %v444, %v441
    %v493 = vpack.c.b16 %v445, %v442
    %v494 = vpack.c.b16 %v446, %v443
    %v544 = vlaneseq
    %v545 = vshrl.u32 %v544, 7
    %v546 = vsub.s32 0, %v545
    %v547 = vrot.slane %v286, %v546
    %v548 = vlaneseq
    %v549 = vshrl.u32 %v548, 7
    %v550 = vsub.s32 1, %v549
    %v551 = vrot.slane %v286, %v550
    %v552 = vlaneseq
    %v553 = vshrl.u32 %v552, 7
    %v554 = vsub.s32 2, %v553
    %v555 = vrot.slane %v286, %v554
    %559 = vmatprep.subr.bf16.mxu0 %v448
    %560 = vmatpush1.bf16.msra.mxu0 %v447
    %561 = vmatprep.subr.bf16.mxu0 %v451
    %562 = vmatpush1.bf16.msra.mxu0 %v450
    %563 = vmatprep.subr.bf16.mxu0 %v454
    %564 = vmatpush1.bf16.msra.mxu0 %v453
    %565 = vmatprep.subr.bf16.mxu0 %v457
    %566 = vmatpush1.bf16.msra.mxu0 %v456
    %567 = vmatprep.subr.bf16.mxu0 %v460
    %568 = vmatpush1.bf16.msra.mxu0 %v459
    %569 = vmatprep.subr.bf16.mxu0 %v463
    %570 = vmatpush1.bf16.msra.mxu0 %v462
    %571 = vmatprep.subr.bf16.mxu0 %v466
    %572 = vmatpush1.bf16.msra.mxu0 %v465
    %573 = vmatprep.subr.bf16.mxu0 %v469
    %574 = vmatpush1.bf16.msra.mxu0 %v468
    %575 = vmatprep.subr.bf16.mxu0 %v472
    %576 = vmatpush1.bf16.msra.mxu0 %v471
    %577 = vmatprep.subr.bf16.mxu0 %v475
    %578 = vmatpush1.bf16.msra.mxu0 %v474
    %579 = vmatprep.subr.bf16.mxu0 %v478
    %580 = vmatpush1.bf16.msra.mxu0 %v477
    %581 = vmatprep.subr.bf16.mxu0 %v481
    %582 = vmatpush1.bf16.msra.mxu0 %v480
    %583 = vmatprep.subr.bf16.mxu0 %v484
    %584 = vmatpush1.bf16.msra.mxu0 %v483
    %585 = vmatprep.subr.bf16.mxu0 %v487
    %586 = vmatpush1.bf16.msra.mxu0 %v486
    %587 = vmatprep.subr.bf16.mxu0 %v490
    %588 = vmatpush1.bf16.msra.mxu0 %v489
    %589 = vmatprep.subr.bf16.mxu0 %v493
    %590 = vmatpush1.bf16.msra.mxu0 %v492
    %591 = vmatprep.mubr.bf16.mxu0 %v221
    %592 = vmatmul.mubr.bf16.gmra.mrb[0].mxu0 %v220
    %v593 = vpop.f32.mrb[0].mxu0
    %v594 = vadd.f32 %v547, %v593
    %v595 = vpop.f32.mrb[0].mxu0
    %v596 = vadd.f32 %v551, %v595
    %v597 = vpop.f32.mrb[0].mxu0
    %v598 = vpop.f32.mrb[0].mxu0
    %599 = vdwg.mxu0
    %600 = vmatprep.subr.bf16.mxu0 0
    %601 = vmatpush1.bf16.msra.mxu0 %v449
    %602 = vmatprep.subr.bf16.mxu0 0
    %603 = vmatpush1.bf16.msra.mxu0 %v452
    %604 = vmatprep.subr.bf16.mxu0 0
    %605 = vmatpush1.bf16.msra.mxu0 %v455
    %606 = vmatprep.subr.bf16.mxu0 0
    %607 = vmatpush1.bf16.msra.mxu0 %v458
    %608 = vmatprep.subr.bf16.mxu0 0
    %609 = vmatpush1.bf16.msra.mxu0 %v461
    %610 = vmatprep.subr.bf16.mxu0 0
    %611 = vmatpush1.bf16.msra.mxu0 %v464
    %612 = vmatprep.subr.bf16.mxu0 0
    %613 = vmatpush1.bf16.msra.mxu0 %v467
    %614 = vmatprep.subr.bf16.mxu0 0
    %615 = vmatpush1.bf16.msra.mxu0 %v470
    %616 = vmatprep.subr.bf16.mxu0 0
    %617 = vmatpush1.bf16.msra.mxu0 %v473
    %618 = vmatprep.subr.bf16.mxu0 0
    %619 = vmatpush1.bf16.msra.mxu0 %v476
    %620 = vmatprep.subr.bf16.mxu0 0
    %621 = vmatpush1.bf16.msra.mxu0 %v479
    %622 = vmatprep.subr.bf16.mxu0 0
    %623 = vmatpush1.bf16.msra.mxu0 %v482
    %624 = vmatprep.subr.bf16.mxu0 0
    %625 = vmatpush1.bf16.msra.mxu0 %v485
    %626 = vmatprep.subr.bf16.mxu0 0
    %627 = vmatpush1.bf16.msra.mxu0 %v488
    %628 = vmatprep.subr.bf16.mxu0 0
    %629 = vmatpush1.bf16.msra.mxu0 %v491
    %630 = vmatprep.subr.bf16.mxu0 0
    %631 = vmatpush1.bf16.msra.mxu0 %v494
    %632 = vmatprep.mubr.bf16.mxu0 %v221
    %633 = vmatmul.mubr.bf16.gmra.mrb[0].mxu0 %v220
    %v634 = vpop.f32.mrb[0].mxu0
    %v635 = vadd.f32 %v555, %v634
    %v636 = vpop.f32.mrb[0].mxu0
    %v637 = vpop.f32.mrb[0].mxu0
    %v638 = vpop.f32.mrb[0].mxu0
    %639 = vdwg.mxu0
    %v640 = vld [vmem:[#allocation8] sm:$0xf]
    %v641 = vld [vmem:[#allocation8 + $0x4] sm:$0xf]
    %v642 = vld [vmem:[#allocation8 + $0x8] sm:$0xf]
    %v643 = vld [vmem:[#allocation8 + $0xc] sm:$0xf]
    %v644 = vld [vmem:[#allocation8 + $0x10] sm:$0xf]
    %v645 = vld [vmem:[#allocation8 + $0x14] sm:$0xf]
    %v646 = vld [vmem:[#allocation8 + $0x18] sm:$0xf]
    %v647 = vld [vmem:[#allocation8 + $0x1c] sm:$0xf]
    %v648 = vld [vmem:[#allocation8 + $0x20] sm:$0xf]
    %v649 = vld [vmem:[#allocation8 + $0x24] sm:$0xf]
    %v650 = vld [vmem:[#allocation8 + $0x28] sm:$0xf]
    %v651 = vld [vmem:[#allocation8 + $0x2c] sm:$0xf]
    %v652 = vld [vmem:[#allocation8 + $0x30] sm:$0xf]
    %v653 = vld [vmem:[#allocation8 + $0x34] sm:$0xf]
    %v654 = vld [vmem:[#allocation8 + $0x38] sm:$0xf]
    %v655 = vld [vmem:[#allocation8 + $0x3c] sm:$0xf]
    %v656 = vld [vmem:[%s7] sm:$0x1]
    %v673 = vunpack.c.l.b16 %v640
    %v674 = vunpack.c.l.b16 %v641
    %v675 = vunpack.c.l.b16 %v642
    %v676 = vunpack.c.l.b16 %v643
    %v677 = vunpack.c.l.b16 %v644
    %v678 = vunpack.c.l.b16 %v645
    %v679 = vunpack.c.l.b16 %v646
    %v680 = vunpack.c.l.b16 %v647
    %v681 = vunpack.c.l.b16 %v648
    %v682 = vunpack.c.l.b16 %v649
    %v683 = vunpack.c.l.b16 %v650
    %v684 = vunpack.c.l.b16 %v651
    %v685 = vunpack.c.l.b16 %v652
    %v686 = vunpack.c.l.b16 %v653
    %v687 = vunpack.c.l.b16 %v654
    %v688 = vunpack.c.l.b16 %v655
    %v689 = vpack.c.b16 %v674, %v673
    %v690 = vpack.c.b16 %v676, %v675
    %v691 = vpack.c.b16 %v678, %v677
    %v692 = vpack.c.b16 %v680, %v679
    %v693 = vpack.c.b16 %v682, %v681
    %v694 = vpack.c.b16 %v684, %v683
    %v695 = vpack.c.b16 %v686, %v685
    %v696 = vpack.c.b16 %v688, %v687
    %705 = vmatprep.subr.bf16.mxu0 0
    %706 = vmatpush1.bf16.msra.mxu0 %v689
    %707 = vmatprep.subr.bf16.mxu0 0
    %708 = vmatpush1.bf16.msra.mxu0 %v690
    %709 = vmatprep.subr.bf16.mxu0 0
    %710 = vmatpush1.bf16.msra.mxu0 %v691
    %711 = vmatprep.subr.bf16.mxu0 0
    %712 = vmatpush1.bf16.msra.mxu0 %v692
    %713 = vmatprep.subr.bf16.mxu0 0
    %714 = vmatpush1.bf16.msra.mxu0 %v693
    %715 = vmatprep.subr.bf16.mxu0 0
    %716 = vmatpush1.bf16.msra.mxu0 %v694
    %717 = vmatprep.subr.bf16.mxu0 0
    %718 = vmatpush1.bf16.msra.mxu0 %v695
    %719 = vmatprep.subr.bf16.mxu0 0
    %720 = vmatpush1.bf16.msra.mxu0 %v696
    %721 = vmatprep.subr.bf16.mxu0 0
    %722 = vmatpush1.bf16.msra.mxu0 0
    %723 = vmatprep.subr.bf16.mxu0 0
    %724 = vmatpush1.bf16.msra.mxu0 0
    %725 = vmatprep.subr.bf16.mxu0 0
    %726 = vmatpush1.bf16.msra.mxu0 0
    %727 = vmatprep.subr.bf16.mxu0 0
    %728 = vmatpush1.bf16.msra.mxu0 0
    %729 = vmatprep.subr.bf16.mxu0 0
    %730 = vmatpush1.bf16.msra.mxu0 0
    %731 = vmatprep.subr.bf16.mxu0 0
    %732 = vmatpush1.bf16.msra.mxu0 0
    %733 = vmatprep.subr.bf16.mxu0 0
    %734 = vmatpush1.bf16.msra.mxu0 0
    %735 = vmatprep.subr.bf16.mxu0 0
    %736 = vmatpush1.bf16.msra.mxu0 0
    %737 = vmatprep.mubr.bf16.mxu0 0
    %738 = vmatmul.mubr.bf16.gmra.mrb[0].mxu0 %v221
    %v739 = vpop.f32.mrb[0].mxu0
    %v740 = vadd.f32 %v656, %v739
    %v741 = vpop.f32.mrb[0].mxu0
    %v742 = vpop.f32.mrb[0].mxu0
    %v743 = vpop.f32.mrb[0].mxu0
    %744 = vdwg.mxu0
    %v745 = vxor.u32 %v594, 2147483648
    %v746 = vmul.f32 %v745, 1.442695
    %v747 = vpow.pop %v746
    %v748 = vadd.f32 %v747, 1.0
    %v749 = vrcp.pop %v748
    %v750 = vmul.f32 1.0, %v749
    %v751 = vxor.u32 %v596, 2147483648
    %v752 = vmul.f32 %v751, 1.442695
    %v753 = vpow.pop %v752
    %v754 = vadd.f32 %v753, 1.0
    %v755 = vrcp.pop %v754
    %v756 = vmul.f32 1.0, %v755
    %v757 = vsub.f32 %v635, %v740
    %v758 = vmul.f32 %v750, %v740
    %v759 = vadd.f32 %v757, %v758
    %v760 = vtanh.pop %v759
    %v761 = vsub.f32 1.0, %v756
    %v762 = vmul.f32 %v761, %v760
    %v763 = vmul.f32 %v756, %v112
    %v764 = vadd.f32 %v762, %v763
    %765 = vst [vmem:[#allocation12] sm:$0x1] %v764
    %v766 = vpack.c.bf16 %v764, %v764
    %v767 = vld [vmem:[#allocation10] sm:$0xff]
    %v768 = vld [vmem:[#allocation10 + $0x8] sm:$0xff]
    %v769 = vld [vmem:[#allocation10 + $0x10] sm:$0xff]
    %v770 = vld [vmem:[#allocation10 + $0x18] sm:$0xff]
    %v771 = vld [vmem:[#allocation10 + $0x20] sm:$0xff]
    %v772 = vld [vmem:[#allocation10 + $0x28] sm:$0xff]
    %v773 = vld [vmem:[#allocation10 + $0x30] sm:$0xff]
    %v774 = vld [vmem:[#allocation10 + $0x38] sm:$0xff]
    %v775 = vld [vmem:[#allocation10 + $0x40] sm:$0xff]
    %v776 = vld [vmem:[#allocation10 + $0x48] sm:$0xff]
    %v777 = vld [vmem:[#allocation10 + $0x50] sm:$0xff]
    %v778 = vld [vmem:[#allocation10 + $0x58] sm:$0xff]
    %v779 = vld [vmem:[#allocation10 + $0x60] sm:$0xff]
    %v780 = vld [vmem:[#allocation10 + $0x68] sm:$0xff]
    %v781 = vld [vmem:[#allocation10 + $0x70] sm:$0xff]
    %v782 = vld [vmem:[#allocation10 + $0x78] sm:$0xff]
    %v783 = vld [vmem:[%s9] sm:$0x3]
    %v800 = vunpack.c.l.b16 %v767
    %v801 = vunpack.c.h.b16 %v767
    %v802 = vunpack.c.l.b16 %v768
    %v803 = vunpack.c.h.b16 %v768
    %v804 = vunpack.c.l.b16 %v769
    %v805 = vunpack.c.h.b16 %v769
    %v806 = vunpack.c.l.b16 %v770
    %v807 = vunpack.c.h.b16 %v770
    %v808 = vunpack.c.l.b16 %v771
    %v809 = vunpack.c.h.b16 %v771
    %v810 = vunpack.c.l.b16 %v772
    %v811 = vunpack.c.h.b16 %v772
    %v812 = vunpack.c.l.b16 %v773
    %v813 = vunpack.c.h.b16 %v773
    %v814 = vunpack.c.l.b16 %v774
    %v815 = vunpack.c.h.b16 %v774
    %v816 = vunpack.c.l.b16 %v775
    %v817 = vunpack.c.h.b16 %v775
    %v818 = vunpack.c.l.b16 %v776
    %v819 = vunpack.c.h.b16 %v776
    %v820 = vunpack.c.l.b16 %v777
    %v821 = vunpack.c.h.b16 %v777
    %v822 = vunpack.c.l.b16 %v778
    %v823 = vunpack.c.h.b16 %v778
    %v824 = vunpack.c.l.b16 %v779
    %v825 = vunpack.c.h.b16 %v779
    %v826 = vunpack.c.l.b16 %v780
    %v827 = vunpack.c.h.b16 %v780
    %v828 = vunpack.c.l.b16 %v781
    %v829 = vunpack.c.h.b16 %v781
    %v830 = vunpack.c.l.b16 %v782
    %v831 = vunpack.c.h.b16 %v782
    %v832 = vpack.c.b16 %v802, %v800
    %v833 = vpack.c.b16 %v803, %v801
    %v834 = vpack.c.b16 %v806, %v804
    %v835 = vpack.c.b16 %v807, %v805
    %v836 = vpack.c.b16 %v810, %v808
    %v837 = vpack.c.b16 %v811, %v809
    %v838 = vpack.c.b16 %v814, %v812
    %v839 = vpack.c.b16 %v815, %v813
    %v840 = vpack.c.b16 %v818, %v816
    %v841 = vpack.c.b16 %v819, %v817
    %v842 = vpack.c.b16 %v822, %v820
    %v843 = vpack.c.b16 %v823, %v821
    %v844 = vpack.c.b16 %v826, %v824
    %v845 = vpack.c.b16 %v827, %v825
    %v846 = vpack.c.b16 %v830, %v828
    %v847 = vpack.c.b16 %v831, %v829
    %v865 = vlaneseq
    %v866 = vshrl.u32 %v865, 7
    %v867 = vsub.s32 0, %v866
    %v868 = vrot.slane %v783, %v867
    %v869 = vlaneseq
    %v870 = vshrl.u32 %v869, 7
    %v871 = vsub.s32 1, %v870
    %v872 = vrot.slane %v783, %v871
    %875 = vmatprep.subr.bf16.mxu0 %v833
    %876 = vmatpush1.bf16.msra.mxu0 %v832
    %877 = vmatprep.subr.bf16.mxu0 %v835
    %878 = vmatpush1.bf16.msra.mxu0 %v834
    %879 = vmatprep.subr.bf16.mxu0 %v837
    %880 = vmatpush1.bf16.msra.mxu0 %v836
    %881 = vmatprep.subr.bf16.mxu0 %v839
    %882 = vmatpush1.bf16.msra.mxu0 %v838
    %883 = vmatprep.subr.bf16.mxu0 %v841
    %884 = vmatpush1.bf16.msra.mxu0 %v840
    %885 = vmatprep.subr.bf16.mxu0 %v843
    %886 = vmatpush1.bf16.msra.mxu0 %v842
    %887 = vmatprep.subr.bf16.mxu0 %v845
    %888 = vmatpush1.bf16.msra.mxu0 %v844
    %889 = vmatprep.subr.bf16.mxu0 %v847
    %890 = vmatpush1.bf16.msra.mxu0 %v846
    %891 = vmatprep.subr.bf16.mxu0 0
    %892 = vmatpush1.bf16.msra.mxu0 0
    %893 = vmatprep.subr.bf16.mxu0 0
    %894 = vmatpush1.bf16.msra.mxu0 0
    %895 = vmatprep.subr.bf16.mxu0 0
    %896 = vmatpush1.bf16.msra.mxu0 0
    %897 = vmatprep.subr.bf16.mxu0 0
    %898 = vmatpush1.bf16.msra.mxu0 0
    %899 = vmatprep.subr.bf16.mxu0 0
    %900 = vmatpush1.bf16.msra.mxu0 0
    %901 = vmatprep.subr.bf16.mxu0 0
    %902 = vmatpush1.bf16.msra.mxu0 0
    %903 = vmatprep.subr.bf16.mxu0 0
    %904 = vmatpush1.bf16.msra.mxu0 0
    %905 = vmatprep.subr.bf16.mxu0 0
    %906 = vmatpush1.bf16.msra.mxu0 0
    %907 = vmatprep.mubr.bf16.mxu0 0
    %908 = vmatmul.mubr.bf16.gmra.mrb[0].mxu0 %v766
    %v909 = vpop.f32.mrb[0].mxu0
    %v910 = vadd.f32 %v868, %v909
    %v911 = vpop.f32.mrb[0].mxu0
    %v912 = vadd.f32 %v872, %v911
    %v913 = vpop.f32.mrb[0].mxu0
    %v914 = vpop.f32.mrb[0].mxu0
    %915 = vdwg.mxu0
    %vm916 = vcmask 1040384
    %v917 = vsel %vm916, %v910, -inf
    %v918 = vsel %vm916, %v912, -inf
    %v919 = vmax.f32 %v917, %v918
    %920 = vmax.xlane.f32.xlu0 %v919
    %v921 = vpop.xlane.xlu0 %920
    %v922 = vsub.f32 %v910, %v921
    %v923 = vsub.f32 %v912, %v921
    %v924 = vmul.f32 %v922, 1.442695
    %v925 = vpow.pop %v924
    %v926 = vmul.f32 %v923, 1.442695
    %v927 = vpow.pop %v926
    %v928 = vsel %vm916, %v925, 0.0
    %v929 = vsel %vm916, %v927, 0.0
    %v930 = vadd.f32 %v928, %v929
    %931 = vadd.xlane.f32.xlu0 %v930
    %v932 = vpop.xlane.xlu0 %931
    %v933 = vlog2.pop %v932
    %v934 = vmul.f32 %v933, 0.6931472
    %v935 = vsub.f32 %v922, %v934
    %v936 = vsub.f32 %v923, %v934
    %v939 = vcombine.low %v935, %v936
    %v941 = vunpack.c.l.s4 1966171168
    %v942 = vunpack.c.0.s8 %v941
    %v943 = vlaneseq
    %v944 = vshrl.u32 %v943, 7
    %v945 = vsub.s32 %v942, %v944
    %v946 = vrot.slane %v939, %v945
    %v948 = vunpack.c.l.s4 1966171168
    %v949 = vunpack.c.0.s8 %v948
    %v950 = vlaneseq
    %v951 = vshrl.u32 %v950, 7
    %v952 = vsub.s32 %v949, %v951
    %v953 = vrot.slane %v946, %v952
    %v955 = vlaneseq
    %vm956 = vcmp.ge.s32.totalorder %v955, 0
    %vm957 = vcmp.lt.s32.totalorder %v955, 256
    %vm958 = vmand %vm956, %vm957
    %959 = vst.msk [vmem:[#allocation11] sm:$0x3] %vm958, %v953
    // Predicated region
    $region66: #{tpu_custom_call.1} parent=1 // pred_check
      _
    $region67: #{tpu_custom_call.1} parent=1 // pred_check_branch
      %961 = sbr.rel (0) target = $region69
    $region68: #{tpu_custom_call.1} parent=1 // pred_region
      %s963 = ssub.s32 32, 32
      %964 = vsyncadd [#allocation4], %s963
      %s966 = sshll.u32 [#allocation11], 4
      %s967 = int_to_ptr.vmem [resolvable:$true] %s966
      %969 = dma.vmem_to_hbm [thread:$0]  %s967, 32, %s10, [#allocation4]
    $region69: #{tpu_custom_call.1} parent=1 // pred_fallthru
      _
    // Predicated region
    $region70: #{tpu_custom_call.1} parent=1 // pred_check
      _
    $region71: #{tpu_custom_call.1} parent=1 // pred_check_branch
      %971 = sbr.rel (0) target = $region73
    $region72: #{tpu_custom_call.1} parent=1 // pred_region
      %s973 = ssub.s32 16, 16
      %974 = vsyncadd [#allocation13], %s973
      %s976 = sshll.u32 [#allocation12], 4
      %s977 = int_to_ptr.vmem [resolvable:$true] %s976
      %979 = dma.vmem_to_hbm [thread:$0]  %s977, 16, %s11, [#allocation13]
    $region73: #{tpu_custom_call.1} parent=1 // pred_fallthru
      _
    // Predicated region
    $region74: #{tpu_custom_call.1} parent=1 // pred_check
      _
    $region75: #{tpu_custom_call.1} parent=1 // pred_check_branch
      %981 = sbr.rel (0) target = $region77
    $region76: #{tpu_custom_call.1} parent=1 // pred_region
      %982 = dma.done [#allocation4], 32
    $region77: #{tpu_custom_call.1} parent=1 // pred_fallthru
      _
    // Predicated region
    $region78: #{tpu_custom_call.1} parent=1 // pred_check
      _
    $region79: #{tpu_custom_call.1} parent=1 // pred_check_branch
      %984 = sbr.rel (0) target = $region81
    $region80: #{tpu_custom_call.1} parent=1 // pred_region
      %985 = dma.done [#allocation13], 16
    $region81: #{tpu_custom_call.1} parent=1 // pred_fallthru
      _
    %986 = vsyncpa [#allocation3], 1
    %987 = vsyncpa [#allocation6], 1
    %988 = vsyncpa [#allocation9], 1
    %989 = vsyncpa [#allocation4], 1
    %990 = vsyncpa [#allocation13], 1

</llo_original>
